<compile_context>
chip_gen: v6e
topology: v6e:2x2x1
jax: 0.10.0
libtpu: 0.0.40
codegen_flags: <defaults>
</compile_context>

<pallas_src>
import functools

import jax
import jax.numpy as jnp
from jax.experimental import pallas as pl
from jax.experimental.pallas import tpu as pltpu


def _sigmoid(x):
    # sigmoid(x) = 0.5 * tanh(0.5 * x) + 0.5 -- a single EUP transcendental
    # per element (vs exp + reciprocal = two pushes), and exact.
    return 0.5 * jnp.tanh(0.5 * x) + 0.5


def hilarity_nn_kernel(x_ref, w1_ref, b1_ref, w2_ref, b2_ref, y_ref):
    # fc1 + act1: h1 = sigmoid(x @ W1 + b1)      (MXU matmul, f32 accumulate)
    a1 = jnp.dot(x_ref[...], w1_ref[...], preferred_element_type=jnp.float32)
    h1 = _sigmoid(a1 + b1_ref[...])              # broadcast [1, H] over rows
    # fc2 + act2 over the lane-padded class dim (full 128 lanes for the MXU).
    a2 = jnp.dot(h1.astype(w2_ref.dtype), w2_ref[...],
                 preferred_element_type=jnp.float32)
    y = _sigmoid(a2 + b2_ref[...])
    # Store only the real C class columns (masked vst; ~16x less HBM write
    # traffic than persisting the 128-lane padded slab).
    y_ref[...] = y[:, : y_ref.shape[-1]].astype(y_ref.dtype)


def pad_classes(w2, b2, lane=128):
    """Pre-pack fc2 params ONCE (outside the per-call path): zero-pad the
    class dim up to a lane multiple so the second matmul uses full lanes."""
    H, C = w2.shape
    c_pad = max(lane, ((C + lane - 1) // lane) * lane)
    w2_p = jnp.zeros((H, c_pad), w2.dtype).at[:, :C].set(w2)
    b2_p = jnp.zeros((1, c_pad), jnp.float32).at[:, :C].set(
        b2.reshape(1, -1).astype(jnp.float32))
    return w2_p, b2_p


def _round_up(v, m):
    return ((v + m - 1) // m) * m


@functools.partial(
    jax.jit, static_argnames=("num_classes", "block_rows", "matmul_dtype"))
def hilarity_nn(x, w1, b1, w2_p, b2_p, *, num_classes,
                block_rows=2048, matmul_dtype=jnp.bfloat16):
    B, K = x.shape
    H = w1.shape[1]
    c_pad = w2_p.shape[1]
    C = num_classes

    isz = jnp.dtype(matmul_dtype).itemsize
    # bf16 vregs pack 16 sublanes; keep rows/tiles 16-aligned for sub-32-bit.
    align = 16 if isz < 4 else 8

    rows = _round_up(B, align)
    tm = min(_round_up(block_rows, align), rows)

    # VMEM gate on the streamed (double-buffered) x tile + output tile.
    stream_bytes_per_row = 2 * (K * isz + C * 4)
    tm_cap = max(align, ((8 << 20) // stream_bytes_per_row) // align * align)
    tm = min(tm, tm_cap)

    # >= 2 grid steps (when the batch allows it) so the "parallel" batch axis
    # can actually be split across both TensorCores on v7x.
    if rows >= 2 * align and tm >= rows:
        tm = _round_up(pl.cdiv(rows, 2), align)

    b_pad = pl.cdiv(rows, tm) * tm

    # Skip the wrapper-side pad copy of x when the batch is already aligned.
    if b_pad == B:
        x_p = x.astype(matmul_dtype)
    else:
        x_p = jnp.zeros((b_pad, K), matmul_dtype).at[:B, :].set(
            x.astype(matmul_dtype))

    w1_c = w1.astype(matmul_dtype)
    w2_c = w2_p.astype(matmul_dtype)
    b1_c = b1.reshape(1, H).astype(jnp.float32)
    b2_c = b2_p.astype(jnp.float32)

    # Resident operands: constant index_map keeps them in VMEM across steps.
    resident = lambda shp: pl.BlockSpec(shp, lambda i: (0, 0))

    # Explicit scoped-VMEM budget (2x margin over the estimate, floored at
    # 16 MiB, capped at 32 MiB so it is valid on v5e/v6e/v7x alike).
    est = (2 * tm * (K * isz + C * 4)
           + (K * H + H * c_pad) * isz + (H + c_pad) * 4)
    vmem_limit = int(min(max(2 * est, 16 << 20), 32 << 20))

    y = pl.pallas_call(
        hilarity_nn_kernel,
        out_shape=jax.ShapeDtypeStruct((b_pad, C), jnp.float32),
        grid=(b_pad // tm,),
        in_specs=[
            pl.BlockSpec((tm, K), lambda i: (i, 0)),   # x: streamed per tile
            resident((K, H)),                          # W1
            resident((1, H)),                          # b1
            resident((H, c_pad)),                      # W2 (lane-padded)
            resident((1, c_pad)),                      # b2 (lane-padded)
        ],
        # Narrow output: last block dim equals the full array dim (C), so
        # only the real classes ever hit HBM; no post-call slice copy needed.
        out_specs=pl.BlockSpec((tm, C), lambda i: (i, 0)),
        compiler_params=pltpu.CompilerParams(
            dimension_semantics=("parallel",),         # megacore on v7x
            vmem_limit_bytes=vmem_limit,
        ),
    )(x_p, w1_c, b1_c, w2_c, b2_c)

    return y if b_pad == B else y[:B]


def _init_linear(key, fan_in, fan_out):
    # Deterministic init mimicking nn.Linear's U(-1/sqrt(fan_in), 1/sqrt(fan_in)).
    kw, kb = jax.random.split(key)
    bound = 1.0 / jnp.sqrt(fan_in)
    w = jax.random.uniform(kw, (fan_in, fan_out), jnp.float32, -bound, bound)
    b = jax.random.uniform(kb, (1, fan_out), jnp.float32, -bound, bound)
    return w, b


if __name__ == "__main__":
    # Small shapes consistent with the module: num_inputs=32, hidden=64, classes=8.
    B, num_inputs, hidden, num_classes = 64, 32, 64, 8

    key = jax.random.PRNGKey(0)
    kx, k1, k2 = jax.random.split(key, 3)

    x = jax.random.normal(kx, (B, num_inputs), jnp.float32)
    w1, b1 = _init_linear(k1, num_inputs, hidden)
    w2, b2 = _init_linear(k2, hidden, num_classes)

    # Pre-pack fc2's lane padding once, outside the per-call path.
    w2_p, b2_p = pad_classes(w2, b2)

    y = hilarity_nn(x, w1, b1, w2_p, b2_p, num_classes=num_classes)
    y = jax.block_until_ready(y)

    # Pure-JAX f32 reference; bf16 MXU operands with f32 accumulation and
    # exact f32 sigmoid keep the error well under 1e-2 at these shapes.
    ref = jax.nn.sigmoid(jax.nn.sigmoid(x @ w1 + b1) @ w2 + b2)
    assert y.shape == (B, num_classes)
    err = float(jnp.max(jnp.abs(y - ref)))
    assert err < 2e-2, err

    print("KERNEL_OK")
</pallas_src>

<mosaic_0001>
module attributes {stable_mosaic.version = 11 : i64} {
  func.func @hilarity_nn_kernel(%arg0: i32, %arg1: memref<32x32xbf16, #tpu.memory_space<vmem>>, %arg2: memref<32x64xbf16, #tpu.memory_space<vmem>>, %arg3: memref<1x64xf32, #tpu.memory_space<vmem>>, %arg4: memref<64x128xbf16, #tpu.memory_space<vmem>>, %arg5: memref<1x128xf32, #tpu.memory_space<vmem>>, %arg6: memref<32x8xf32, #tpu.memory_space<vmem>>) attributes {dimension_semantics = [#tpu.dimension_semantics<parallel>], iteration_bounds = array<i64: 2>, scalar_prefetch = 0 : i64, scratch_operands = 0 : i64, tpu.core_type = #tpu.core_type<tc>, window_params = [{transform_indices = @transform_0, window_bounds = array<i64: 32, 32>}, {pipeline_mode = #tpu.pipeline_mode<synchronous>, transform_indices = @transform_1, window_bounds = array<i64: 32, 64>}, {pipeline_mode = #tpu.pipeline_mode<synchronous>, transform_indices = @transform_2, window_bounds = array<i64: 1, 64>}, {pipeline_mode = #tpu.pipeline_mode<synchronous>, transform_indices = @transform_3, window_bounds = array<i64: 64, 128>}, {pipeline_mode = #tpu.pipeline_mode<synchronous>, transform_indices = @transform_4, window_bounds = array<i64: 1, 128>}, {transform_indices = @transform_5, window_bounds = array<i64: 32, 8>}]} {
    %c0 = arith.constant 0 : index
    %c0_0 = arith.constant 0 : index
    %0 = vector.load %arg1[%c0, %c0_0] : memref<32x32xbf16, #tpu.memory_space<vmem>>, vector<32x32xbf16>
    %c0_1 = arith.constant 0 : index
    %c0_2 = arith.constant 0 : index
    %1 = vector.load %arg2[%c0_1, %c0_2] : memref<32x64xbf16, #tpu.memory_space<vmem>>, vector<32x64xbf16>
    %cst = arith.constant dense<0.000000e+00> : vector<32x64xf32>
    %2 = tpu.matmul %0, %1, %cst {dimension_numbers = #tpu.dot_dimension_numbers<[1], [0], [0], [1], [0, 0, 1, 1], [], []>} : vector<32x32xbf16>, vector<32x64xbf16>, vector<32x64xf32> -> vector<32x64xf32>
    %c0_3 = arith.constant 0 : index
    %c0_4 = arith.constant 0 : index
    %3 = vector.load %arg3[%c0_3, %c0_4] : memref<1x64xf32, #tpu.memory_space<vmem>>, vector<1x64xf32>
    %4 = vector.broadcast %3 : vector<1x64xf32> to vector<32x64xf32>
    %5 = arith.addf %2, %4 : vector<32x64xf32>
    %cst_5 = arith.constant 5.000000e-01 : f32
    %6 = vector.broadcast %cst_5 : f32 to vector<32x64xf32>
    %7 = arith.mulf %6, %5 : vector<32x64xf32>
    %8 = math.tanh %7 : vector<32x64xf32>
    %cst_6 = arith.constant 5.000000e-01 : f32
    %9 = vector.broadcast %cst_6 : f32 to vector<32x64xf32>
    %10 = arith.mulf %9, %8 : vector<32x64xf32>
    %cst_7 = arith.constant 5.000000e-01 : f32
    %11 = vector.broadcast %cst_7 : f32 to vector<32x64xf32>
    %12 = arith.addf %10, %11 : vector<32x64xf32>
    %13 = arith.truncf %12 : vector<32x64xf32> to vector<32x64xbf16>
    %c0_8 = arith.constant 0 : index
    %c0_9 = arith.constant 0 : index
    %14 = vector.load %arg4[%c0_8, %c0_9] : memref<64x128xbf16, #tpu.memory_space<vmem>>, vector<64x128xbf16>
    %cst_10 = arith.constant dense<0.000000e+00> : vector<32x128xf32>
    %15 = tpu.matmul %13, %14, %cst_10 {dimension_numbers = #tpu.dot_dimension_numbers<[1], [0], [0], [1], [0, 0, 1, 1], [], []>} : vector<32x64xbf16>, vector<64x128xbf16>, vector<32x128xf32> -> vector<32x128xf32>
    %c0_11 = arith.constant 0 : index
    %c0_12 = arith.constant 0 : index
    %16 = vector.load %arg5[%c0_11, %c0_12] : memref<1x128xf32, #tpu.memory_space<vmem>>, vector<1x128xf32>
    %17 = vector.broadcast %16 : vector<1x128xf32> to vector<32x128xf32>
    %18 = arith.addf %15, %17 : vector<32x128xf32>
    %cst_13 = arith.constant 5.000000e-01 : f32
    %19 = vector.broadcast %cst_13 : f32 to vector<32x128xf32>
    %20 = arith.mulf %19, %18 : vector<32x128xf32>
    %21 = math.tanh %20 : vector<32x128xf32>
    %cst_14 = arith.constant 5.000000e-01 : f32
    %22 = vector.broadcast %cst_14 : f32 to vector<32x128xf32>
    %23 = arith.mulf %22, %21 : vector<32x128xf32>
    %cst_15 = arith.constant 5.000000e-01 : f32
    %24 = vector.broadcast %cst_15 : f32 to vector<32x128xf32>
    %25 = arith.addf %23, %24 : vector<32x128xf32>
    %26 = vector.extract_strided_slice %25 {offsets = [0, 0], sizes = [32, 8], strides = [1, 1]} : vector<32x128xf32> to vector<32x8xf32>
    %c0_16 = arith.constant 0 : index
    %c0_17 = arith.constant 0 : index
    %27 = vector.load %arg6[%c0_16, %c0_17] : memref<32x8xf32, #tpu.memory_space<vmem>>, vector<32x8xf32>
    tpu.vector_store %arg6[%c0_16, %c0_17], %26 {strides = array<i32>} : memref<32x8xf32, #tpu.memory_space<vmem>>, vector<32x8xf32>,
    return
  }
  func.func @transform_0(%arg0: i32) -> (i32, i32) {
    %c0_i32 = arith.constant 0 : i32
    %c0_i32_0 = arith.constant 0 : i32
    return %arg0, %c0_i32 : i32, i32
  }
  func.func @transform_1(%arg0: i32) -> (i32, i32) {
    %c0_i32 = arith.constant 0 : i32
    %c0_i32_0 = arith.constant 0 : i32
    %c0_i32_1 = arith.constant 0 : i32
    return %c0_i32, %c0_i32_0 : i32, i32
  }
  func.func @transform_2(%arg0: i32) -> (i32, i32) {
    %c0_i32 = arith.constant 0 : i32
    %c0_i32_0 = arith.constant 0 : i32
    %c0_i32_1 = arith.constant 0 : i32
    return %c0_i32, %c0_i32_0 : i32, i32
  }
  func.func @transform_3(%arg0: i32) -> (i32, i32) {
    %c0_i32 = arith.constant 0 : i32
    %c0_i32_0 = arith.constant 0 : i32
    %c0_i32_1 = arith.constant 0 : i32
    return %c0_i32, %c0_i32_0 : i32, i32
  }
  func.func @transform_4(%arg0: i32) -> (i32, i32) {
    %c0_i32 = arith.constant 0 : i32
    %c0_i32_0 = arith.constant 0 : i32
    %c0_i32_1 = arith.constant 0 : i32
    return %c0_i32, %c0_i32_0 : i32, i32
  }
  func.func @transform_5(%arg0: i32) -> (i32, i32) {
    %c0_i32 = arith.constant 0 : i32
    %c0_i32_0 = arith.constant 0 : i32
    return %arg0, %c0_i32 : i32, i32
  }
}

</mosaic_0001>

<llo_original>
// kernel: hilarity_nn.1
$region0: #{hilarity_nn.1}
  #allocation0 [shape = 'u32[]', space=smem, size = 0x4, offset = 0x4, fixed_abs, tag = 'smem constant byte address 0x4 - core index']
  #allocation1 [shape = 'u32[144,128]{1,0:T(1,128)}', space=vmem, size = 0x12000, scoped, tag = 'internal scratch']
  %s0 = inlined_call_operand.vmem [shape: bf16[64,32], index: 0, kind: input, shape index: {}]
  %s1 = inlined_call_operand.vmem [shape: bf16[32,64], index: 1, kind: input, shape index: {}]
  %s2 = inlined_call_operand.vmem [shape: f32[1,64], index: 2, kind: input, shape index: {}]
  %s3 = inlined_call_operand.vmem [shape: bf16[64,128], index: 3, kind: input, shape index: {}]
  %s4 = inlined_call_operand.vmem [shape: f32[1,128], index: 4, kind: input, shape index: {}]
  %s5 = inlined_call_operand.vmem [shape: f32[64,8], index: 5, kind: output, shape index: {}]
  %s6 = sld [smem:[#allocation0]]
  $region53: #{hilarity_nn.1} parent=0
    _
  %s8 = ssub.s32 1, %s6
  %s9 = scalar_select 0, %s8, %s6
  loop: start=0, step=1, limit=4
  $region2: #{hilarity_nn.1} parent=0 // loop_pre_header
    _
  $region3: #{hilarity_nn.1} parent=0 // loop_header
    %s11 = sphi 0, %s15
    %p12 = scmp.ge.s32.totalorder %s11, 4
    %s21 = sphi 0, %s23
    %s24 = sphi 0, %s21
    %s25 = sphi 0, %s24
    %s41 = sphi 0, %s25
    %s45 = sphi 0, %s45
    %s47 = sphi 0, %s45
    %s48 = sphi 0, %s47
    %s62 = sphi 0, %s48
    %s66 = sphi 0, %s66
    %s68 = sphi 0, %s66
    %s69 = sphi 0, %s68
    %s83 = sphi 0, %s69
    %s87 = sphi 0, %s87
    %s89 = sphi 0, %s87
    %s90 = sphi 0, %s89
    %s104 = sphi 0, %s90
    %s108 = sphi 0, %s108
    %s110 = sphi 0, %s108
    %s111 = sphi 0, %s110
    %s125 = sphi 0, %s111
    %s131 = sphi 0, %s133
    %s134 = sphi 0, %s131
    %s135 = sphi 0, %s134
    %s151 = sphi 0, %s135
  $region4: #{hilarity_nn.1} parent=0 // loop_header_branch
    %14 = sbr.rel (%p12) target = $region8
  $region5: #{hilarity_nn.1} parent=0 // loop_body
    %s16 = ssub.s32 %s11, 1
    %s17 = ssub.s32 %s11, 2
    %s18 = sadd.s32 %s11, 1
    %s19 = ssub.s32 %s11, %s18
    %p20 = scmp.eq.s32.totalorder %s19, 0
    %s22 = sadd.s32 %s21, 1
    %s23 = scalar_select %p20, %s21, %s22
    %p26 = pneg %p20
    %p27 = scmp.eq.s32.totalorder %s11, 1
    %p28 = por %p26, %p27
    %p29 = scmp.ne.s32.totalorder %s21, %s24
    %p30 = scmp.eq.s32.totalorder %s11, 0
    %p31 = por %p29, %p30
    %p32 = scmp.ne.s32.totalorder %s21, %s24
    %p33 = scmp.eq.s32.totalorder %s16, 1
    %p34 = por %p32, %p33
    %p35 = scmp.ne.s32.totalorder %s24, %s25
    %p36 = scmp.eq.s32.totalorder %s16, 0
    %p37 = por %p35, %p36
    %p38 = scmp.ne.s32.totalorder %s24, %s25
    %p39 = scmp.eq.s32.totalorder %s17, 1
    %p40 = por %p38, %p39
    %p42 = scmp.ne.s32.totalorder %s25, %s41
    %p43 = scmp.eq.s32.totalorder %s17, 0
    %p44 = por %p42, %p43
    %s46 = sadd.s32 %s45, 1
    %p49 = scmp.eq.s32.totalorder %s11, 1
    %p50 = scmp.ne.s32.totalorder %s45, %s47
    %p51 = scmp.eq.s32.totalorder %s11, 0
    %p52 = por %p50, %p51
    %p53 = scmp.ne.s32.totalorder %s45, %s47
    %p54 = scmp.eq.s32.totalorder %s16, 1
    %p55 = por %p53, %p54
    %p56 = scmp.ne.s32.totalorder %s47, %s48
    %p57 = scmp.eq.s32.totalorder %s16, 0
    %p58 = por %p56, %p57
    %p59 = scmp.ne.s32.totalorder %s47, %s48
    %p60 = scmp.eq.s32.totalorder %s17, 1
    %p61 = por %p59, %p60
    %p63 = scmp.ne.s32.totalorder %s48, %s62
    %p64 = scmp.eq.s32.totalorder %s17, 0
    %p65 = por %p63, %p64
    %s67 = sadd.s32 %s66, 1
    %p70 = scmp.eq.s32.totalorder %s11, 1
    %p71 = scmp.ne.s32.totalorder %s66, %s68
    %p72 = scmp.eq.s32.totalorder %s11, 0
    %p73 = por %p71, %p72
    %p74 = scmp.ne.s32.totalorder %s66, %s68
    %p75 = scmp.eq.s32.totalorder %s16, 1
    %p76 = por %p74, %p75
    %p77 = scmp.ne.s32.totalorder %s68, %s69
    %p78 = scmp.eq.s32.totalorder %s16, 0
    %p79 = por %p77, %p78
    %p80 = scmp.ne.s32.totalorder %s68, %s69
    %p81 = scmp.eq.s32.totalorder %s17, 1
    %p82 = por %p80, %p81
    %p84 = scmp.ne.s32.totalorder %s69, %s83
    %p85 = scmp.eq.s32.totalorder %s17, 0
    %p86 = por %p84, %p85
    %s88 = sadd.s32 %s87, 1
    %p91 = scmp.eq.s32.totalorder %s11, 1
    %p92 = scmp.ne.s32.totalorder %s87, %s89
    %p93 = scmp.eq.s32.totalorder %s11, 0
    %p94 = por %p92, %p93
    %p95 = scmp.ne.s32.totalorder %s87, %s89
    %p96 = scmp.eq.s32.totalorder %s16, 1
    %p97 = por %p95, %p96
    %p98 = scmp.ne.s32.totalorder %s89, %s90
    %p99 = scmp.eq.s32.totalorder %s16, 0
    %p100 = por %p98, %p99
    %p101 = scmp.ne.s32.totalorder %s89, %s90
    %p102 = scmp.eq.s32.totalorder %s17, 1
    %p103 = por %p101, %p102
    %p105 = scmp.ne.s32.totalorder %s90, %s104
    %p106 = scmp.eq.s32.totalorder %s17, 0
    %p107 = por %p105, %p106
    %s109 = sadd.s32 %s108, 1
    %p112 = scmp.eq.s32.totalorder %s11, 1
    %p113 = scmp.ne.s32.totalorder %s108, %s110
    %p114 = scmp.eq.s32.totalorder %s11, 0
    %p115 = por %p113, %p114
    %p116 = scmp.ne.s32.totalorder %s108, %s110
    %p117 = scmp.eq.s32.totalorder %s16, 1
    %p118 = por %p116, %p117
    %p119 = scmp.ne.s32.totalorder %s110, %s111
    %p120 = scmp.eq.s32.totalorder %s16, 0
    %p121 = por %p119, %p120
    %p122 = scmp.ne.s32.totalorder %s110, %s111
    %p123 = scmp.eq.s32.totalorder %s17, 1
    %p124 = por %p122, %p123
    %p126 = scmp.ne.s32.totalorder %s111, %s125
    %p127 = scmp.eq.s32.totalorder %s17, 0
    %p128 = por %p126, %p127
    %s129 = ssub.s32 %s11, %s18
    %p130 = scmp.eq.s32.totalorder %s129, 0
    %s132 = sadd.s32 %s131, 1
    %s133 = scalar_select %p130, %s131, %s132
    %p136 = pneg %p130
    %p137 = scmp.eq.s32.totalorder %s11, 1
    %p138 = por %p136, %p137
    %p139 = scmp.ne.s32.totalorder %s131, %s134
    %p140 = scmp.eq.s32.totalorder %s11, 0
    %p141 = por %p139, %p140
    %p142 = scmp.ne.s32.totalorder %s131, %s134
    %p143 = scmp.eq.s32.totalorder %s16, 1
    %p144 = por %p142, %p143
    %p145 = scmp.ne.s32.totalorder %s134, %s135
    %p146 = scmp.eq.s32.totalorder %s16, 0
    %p147 = por %p145, %p146
    %p148 = scmp.ne.s32.totalorder %s134, %s135
    %p149 = scmp.eq.s32.totalorder %s17, 1
    %p150 = por %p148, %p149
    %p152 = scmp.ne.s32.totalorder %s135, %s151
    %p153 = scmp.eq.s32.totalorder %s17, 0
    %p154 = por %p152, %p153
    %p155 = scmp.le.s32.totalorder 1, %s11
    %p156 = scmp.lt.s32.totalorder %s11, 3
    %p157 = pnand %p155, %p156
    %p158 = pneg %p157
    // Predicated region
    $region9: #{hilarity_nn.1} parent=5 // pred_check
      _
    $region10: #{hilarity_nn.1} parent=5 // pred_check_branch
      %160 = sbr.rel (%p157) target = $region12
    $region11: #{hilarity_nn.1} parent=5 // pred_region
      %s161 = ssub.s32 %s11, 1
      // Predicated region
      $region13: #{hilarity_nn.1} parent=11 // pred_check
        %p162 = pneg %p58
      $region14: #{hilarity_nn.1} parent=11 // pred_check_branch
        %164 = sbr.rel (%p162) target = $region16
      $region15: #{hilarity_nn.1} parent=11 // pred_region
        _
      $region16: #{hilarity_nn.1} parent=11 // pred_fallthru
        _
      // Predicated region
      $region17: #{hilarity_nn.1} parent=11 // pred_check
        %p165 = pneg %p79
      $region18: #{hilarity_nn.1} parent=11 // pred_check_branch
        %167 = sbr.rel (%p165) target = $region20
      $region19: #{hilarity_nn.1} parent=11 // pred_region
        _
      $region20: #{hilarity_nn.1} parent=11 // pred_fallthru
        _
      // Predicated region
      $region21: #{hilarity_nn.1} parent=11 // pred_check
        %p168 = pneg %p100
      $region22: #{hilarity_nn.1} parent=11 // pred_check_branch
        %170 = sbr.rel (%p168) target = $region24
      $region23: #{hilarity_nn.1} parent=11 // pred_region
        _
      $region24: #{hilarity_nn.1} parent=11 // pred_fallthru
        _
      // Predicated region
      $region25: #{hilarity_nn.1} parent=11 // pred_check
        %p171 = pneg %p121
      $region26: #{hilarity_nn.1} parent=11 // pred_check_branch
        %173 = sbr.rel (%p171) target = $region28
      $region27: #{hilarity_nn.1} parent=11 // pred_region
        _
      $region28: #{hilarity_nn.1} parent=11 // pred_fallthru
        _
    $region12: #{hilarity_nn.1} parent=5 // pred_fallthru
      _
    %p174 = scmp.lt.s32.totalorder %s11, 2
    // Predicated region
    $region29: #{hilarity_nn.1} parent=5 // pred_check
      %p175 = pneg %p174
    $region30: #{hilarity_nn.1} parent=5 // pred_check_branch
      %177 = sbr.rel (%p175) target = $region32
    $region31: #{hilarity_nn.1} parent=5 // pred_region
      // Predicated region
      $region33: #{hilarity_nn.1} parent=31 // pred_check
        %p178 = pneg %p31
      $region34: #{hilarity_nn.1} parent=31 // pred_check_branch
        %180 = sbr.rel (%p178) target = $region36
      $region35: #{hilarity_nn.1} parent=31 // pred_region
        %s181 = smul.u32 4, %s11
        %p182 = scmp.lt.s32.totalorder %s181, 7
        %s183 = scalar_select %p182, %s181, 7
        %s184 = smul.addr %s183, 4
        %s185 = scalar_lea.vmem %s0, %s184
        %s186 = smul.u32 4, %s11
      $region36: #{hilarity_nn.1} parent=31 // pred_fallthru
        _
    $region32: #{hilarity_nn.1} parent=5 // pred_fallthru
      _
    %p187 = scmp.le.s32.totalorder 1, %s11
    %p188 = scmp.lt.s32.totalorder %s11, 3
    %p189 = pnand %p187, %p188
    %p190 = pneg %p189
    // Predicated region
    $region37: #{hilarity_nn.1} parent=5 // pred_check
      _
    $region38: #{hilarity_nn.1} parent=5 // pred_check_branch
      %192 = sbr.rel (%p189) target = $region40
    $region39: #{hilarity_nn.1} parent=5 // pred_region
      %s193 = ssub.s32 %s11, 1
      %s194 = smul.u32 4, %s16
      %p195 = scmp.lt.s32.totalorder %s194, 7
      %s196 = scalar_select %p195, %s194, 7
      %s197 = smul.addr %s196, 4
      %s198 = scalar_lea.vmem %s0, %s197
      %p199 = pneg %p37
      %p200 = pneg %p34
      %p201 = pneg %p58
      %p202 = pneg %p55
      %p203 = pneg %p79
      %p204 = pneg %p76
      %p205 = pneg %p100
      %p206 = pneg %p97
      %p207 = pneg %p121
      %p208 = pneg %p118
      %p209 = pneg %p147
      %p210 = pneg %p144
      %s211 = smul.u32 4, %s16
      %p212 = scmp.lt.s32.totalorder %s211, 7
      %s213 = scalar_select %p212, %s211, 7
      %s214 = smul.addr %s213, 8
      %s215 = scalar_lea.vmem %s5, %s214
      %s216 = smul.u32 4, %s16
      %p217 = scmp.lt.s32.totalorder %s216, 7
      %s218 = scalar_select %p217, %s216, 7
      %s219 = smul.addr %s218, 4
      %s220 = scalar_lea.vmem %s0, %s219
      %s221 = smul.u32 4, %s16
      %s222 = smul.u32 4, %s16
      %p223 = scmp.lt.s32.totalorder %s222, 7
      %s224 = scalar_select %p223, %s222, 7
      %s225 = smul.addr %s224, 8
      %s226 = scalar_lea.vmem %s5, %s225
      %s227 = smul.u32 4, %s16
      %v229 = vld [vmem:[%s220] sm:$0xf]
      %v230 = vld [vmem:[%s220 + $0x4] sm:$0xf]
      %v231 = vld [vmem:[%s220 + $0x8] sm:$0xf]
      %v232 = vld [vmem:[%s220 + $0xc] sm:$0xf]
      %v233 = vld [vmem:[%s1] sm:$0xf]
      %v234 = vld [vmem:[%s1 + $0x4] sm:$0xf]
      %v235 = vld [vmem:[%s1 + $0x8] sm:$0xf]
      %v236 = vld [vmem:[%s1 + $0xc] sm:$0xf]
      %v237 = vld [vmem:[%s2] sm:$0x1]
      %v239 = vlaneseq
      %v240 = vshrl.u32 %v239, 7
      %v241 = vsub.s32 0, %v240
      %v242 = vrot.slane %v237, %v241
      %v248 = vunpack.c.l.b16 %v229
      %v249 = vunpack.c.l.b16 %v230
      %v250 = vunpack.c.l.b16 %v231
      %v251 = vunpack.c.l.b16 %v232
      %v252 = vpack.c.b16 %v249, %v248
      %v253 = vpack.c.b16 %v251, %v250
      %v258 = vunpack.c.l.b16 %v233
      %v259 = vunpack.c.l.b16 %v234
      %v260 = vunpack.c.l.b16 %v235
      %v261 = vunpack.c.l.b16 %v236
      %v262 = vpack.c.b16 %v259, %v258
      %v263 = vpack.c.b16 %v261, %v260
      %vm266 = vcmask 261120
      %v268 = vsel %vm266, %v252, 0
      %v271 = vsel %vm266, %v253, 0
      %273 = vmatprep.subr.bf16.mxu0 0
      %274 = vmatpush1.bf16.msra.mxu0 0
      %275 = vmatprep.subr.bf16.mxu0 0
      %276 = vmatpush1.bf16.msra.mxu0 0
      %277 = vmatprep.subr.bf16.mxu0 0
      %278 = vmatpush1.bf16.msra.mxu0 0
      %279 = vmatprep.subr.bf16.mxu0 0
      %280 = vmatpush1.bf16.msra.mxu0 0
      %281 = vmatprep.subr.bf16.mxu0 0
      %282 = vmatpush1.bf16.msra.mxu0 0
      %283 = vmatprep.subr.bf16.mxu0 0
      %284 = vmatpush1.bf16.msra.mxu0 0
      %285 = vmatprep.subr.bf16.mxu0 0
      %286 = vmatpush1.bf16.msra.mxu0 %v263
      %287 = vmatprep.subr.bf16.mxu0 0
      %288 = vmatpush1.bf16.msra.mxu0 %v262
      %289 = vmatprep.subr.bf16.mxu0 0
      %290 = vmatpush2.bf16.msra.mxu0 0
      %291 = vmatprep.subr.bf16.mxu0 0
      %292 = vmatpush2.bf16.msra.mxu0 0
      %293 = vmatprep.subr.bf16.mxu0 0
      %294 = vmatpush2.bf16.msra.mxu0 0
      %295 = vmatprep.subr.bf16.mxu0 0
      %296 = vmatpush2.bf16.msra.mxu0 0
      %297 = vmatprep.subr.bf16.mxu0 0
      %298 = vmatpush2.bf16.msra.mxu0 0
      %299 = vmatprep.subr.bf16.mxu0 0
      %300 = vmatpush2.bf16.msra.mxu0 0
      %301 = vmatprep.subr.bf16.mxu0 0
      %302 = vmatpush2.bf16.msra.mxu0 0
      %303 = vmatprep.subr.bf16.mxu0 0
      %304 = vmatpush2.bf16.msra.mxu0 0
      %305 = vmatprep.mubr.bf16.mxu0 0
      %306 = vmatmul.mubr.bf16.gmra.mxu0 %v268
      %v307 = vpop.f32.mrf.mxu0
      %v308 = vadd.f32 %v242, %v307
      %v309 = vpop.f32.mrf.mxu0
      %v310 = vpop.f32.mrf.mxu0
      %v311 = vadd.f32 %v242, %v310
      %v312 = vpop.f32.mrf.mxu0
      %313 = vmatprep.mubr.bf16.mxu0 0
      %314 = vmatmul.mubr.bf16.gmra.mxu0 %v271
      %v315 = vpop.f32.mrf.mxu0
      %v316 = vadd.f32 %v242, %v315
      %v317 = vpop.f32.mrf.mxu0
      %v318 = vpop.f32.mrf.mxu0
      %v319 = vadd.f32 %v242, %v318
      %v320 = vpop.f32.mrf.mxu0
      %321 = vdwg.mxu0
      %v322 = vmul.f32 %v308, 0.5
      %v323 = vmul.f32 %v311, 0.5
      %v324 = vmul.f32 %v316, 0.5
      %v325 = vmul.f32 %v319, 0.5
      %v326 = vtanh.pop %v322
      %v327 = vtanh.pop %v323
      %v328 = vtanh.pop %v324
      %v329 = vtanh.pop %v325
      %v330 = vmul.f32 %v326, 0.5
      %v331 = vmul.f32 %v327, 0.5
      %v332 = vmul.f32 %v328, 0.5
      %v333 = vmul.f32 %v329, 0.5
      %v334 = vadd.f32 %v330, 0.5
      %v335 = vadd.f32 %v331, 0.5
      %v336 = vadd.f32 %v332, 0.5
      %v337 = vadd.f32 %v333, 0.5
      %v338 = vpack.c.bf16 %v335, %v334
      %v339 = vpack.c.bf16 %v337, %v336
      %v340 = vld [vmem:[%s3] sm:$0xf]
      %v341 = vld [vmem:[%s3 + $0x4] sm:$0xf]
      %v342 = vld [vmem:[%s3 + $0x8] sm:$0xf]
      %v343 = vld [vmem:[%s3 + $0xc] sm:$0xf]
      %v344 = vld [vmem:[%s3 + $0x10] sm:$0xf]
      %v345 = vld [vmem:[%s3 + $0x14] sm:$0xf]
      %v346 = vld [vmem:[%s3 + $0x18] sm:$0xf]
      %v347 = vld [vmem:[%s3 + $0x1c] sm:$0xf]
      %v348 = vld [vmem:[%s4] sm:$0x1]
      %v350 = vlaneseq
      %v351 = vshrl.u32 %v350, 7
      %v352 = vsub.s32 0, %v351
      %v353 = vrot.slane %v348, %v352
      %v363 = vunpack.c.l.b16 %v340
      %v364 = vunpack.c.l.b16 %v341
      %v365 = vunpack.c.l.b16 %v342
      %v366 = vunpack.c.l.b16 %v343
      %v367 = vunpack.c.l.b16 %v344
      %v368 = vunpack.c.l.b16 %v345
      %v369 = vunpack.c.l.b16 %v346
      %v370 = vunpack.c.l.b16 %v347
      %v371 = vpack.c.b16 %v364, %v363
      %v372 = vpack.c.b16 %v366, %v365
      %v373 = vpack.c.b16 %v368, %v367
      %v374 = vpack.c.b16 %v370, %v369
      %vm379 = vcmask 523264
      %v381 = vsel %vm379, %v338, 0
      %v384 = vsel %vm379, %v339, 0
      %386 = vmatprep.subr.bf16.mxu0 0
      %387 = vmatpush1.bf16.msra.mxu0 0
      %388 = vmatprep.subr.bf16.mxu0 0
      %389 = vmatpush1.bf16.msra.mxu0 0
      %390 = vmatprep.subr.bf16.mxu0 0
      %391 = vmatpush1.bf16.msra.mxu0 0
      %392 = vmatprep.subr.bf16.mxu0 0
      %393 = vmatpush1.bf16.msra.mxu0 0
      %394 = vmatprep.subr.bf16.mxu0 0
      %395 = vmatpush1.bf16.msra.mxu0 %v374
      %396 = vmatprep.subr.bf16.mxu0 0
      %397 = vmatpush1.bf16.msra.mxu0 %v373
      %398 = vmatprep.subr.bf16.mxu0 0
      %399 = vmatpush1.bf16.msra.mxu0 %v372
      %400 = vmatprep.subr.bf16.mxu0 0
      %401 = vmatpush1.bf16.msra.mxu0 %v371
      %402 = vmatprep.subr.bf16.mxu0 0
      %403 = vmatpush2.bf16.msra.mxu0 0
      %404 = vmatprep.subr.bf16.mxu0 0
      %405 = vmatpush2.bf16.msra.mxu0 0
      %406 = vmatprep.subr.bf16.mxu0 0
      %407 = vmatpush2.bf16.msra.mxu0 0
      %408 = vmatprep.subr.bf16.mxu0 0
      %409 = vmatpush2.bf16.msra.mxu0 0
      %410 = vmatprep.subr.bf16.mxu0 0
      %411 = vmatpush2.bf16.msra.mxu0 0
      %412 = vmatprep.subr.bf16.mxu0 0
      %413 = vmatpush2.bf16.msra.mxu0 0
      %414 = vmatprep.subr.bf16.mxu0 0
      %415 = vmatpush2.bf16.msra.mxu0 0
      %416 = vmatprep.subr.bf16.mxu0 0
      %417 = vmatpush2.bf16.msra.mxu0 0
      %418 = vmatprep.mubr.bf16.mxu0 0
      %419 = vmatmul.mubr.bf16.gmra.mxu0 %v381
      %v420 = vpop.f32.mrf.mxu0
      %v421 = vadd.f32 %v353, %v420
      %v422 = vpop.f32.mrf.mxu0
      %v423 = vpop.f32.mrf.mxu0
      %v424 = vadd.f32 %v353, %v423
      %v425 = vpop.f32.mrf.mxu0
      %426 = vmatprep.mubr.bf16.mxu0 0
      %427 = vmatmul.mubr.bf16.gmra.mxu0 %v384
      %v428 = vpop.f32.mrf.mxu0
      %v429 = vadd.f32 %v353, %v428
      %v430 = vpop.f32.mrf.mxu0
      %v431 = vpop.f32.mrf.mxu0
      %v432 = vadd.f32 %v353, %v431
      %v433 = vpop.f32.mrf.mxu0
      %434 = vdwg.mxu0
      %v435 = vmul.f32 %v421, 0.5
      %v436 = vmul.f32 %v424, 0.5
      %v437 = vmul.f32 %v429, 0.5
      %v438 = vmul.f32 %v432, 0.5
      %v439 = vtanh.pop %v435
      %v440 = vtanh.pop %v436
      %v441 = vtanh.pop %v437
      %v442 = vtanh.pop %v438
      %v443 = vmul.f32 %v439, 0.5
      %v444 = vmul.f32 %v440, 0.5
      %v445 = vmul.f32 %v441, 0.5
      %v446 = vmul.f32 %v442, 0.5
      %v447 = vadd.f32 %v443, 0.5
      %v448 = vadd.f32 %v444, 0.5
      %v449 = vadd.f32 %v445, 0.5
      %v450 = vadd.f32 %v446, 0.5
      %vm451 = vcmask 64512
      %452 = vst.msk [vmem:[%s226] sm:$0xff] %vm451, %v447
      %453 = vst.msk [vmem:[%s226 + $0x8] sm:$0xff] %vm451, %v448
      %454 = vst.msk [vmem:[%s226 + $0x10] sm:$0xff] %vm451, %v449
      %455 = vst.msk [vmem:[%s226 + $0x18] sm:$0xff] %vm451, %v450
      %s456 = smul.u32 4, %s16
      %p457 = scmp.lt.s32.totalorder %s456, 7
      %s458 = scalar_select %p457, %s456, 7
      %s459 = smul.addr %s458, 8
      %s460 = scalar_lea.vmem %s5, %s459
      // Predicated region
      $region41: #{hilarity_nn.1} parent=39 // pred_check
        %p461 = pneg %p144
      $region42: #{hilarity_nn.1} parent=39 // pred_check_branch
        %463 = sbr.rel (%p461) target = $region44
      $region43: #{hilarity_nn.1} parent=39 // pred_region
        %s464 = smul.u32 4, %s16
      $region44: #{hilarity_nn.1} parent=39 // pred_fallthru
        _
    $region40: #{hilarity_nn.1} parent=5 // pred_fallthru
      _
    %p465 = scmp.le.s32.totalorder 2, %s11
    // Predicated region
    $region45: #{hilarity_nn.1} parent=5 // pred_check
      %p466 = pneg %p465
    $region46: #{hilarity_nn.1} parent=5 // pred_check_branch
      %468 = sbr.rel (%p466) target = $region48
    $region47: #{hilarity_nn.1} parent=5 // pred_region
      %s469 = ssub.s32 %s11, 2
      // Predicated region
      $region49: #{hilarity_nn.1} parent=47 // pred_check
        %p470 = pneg %p150
      $region50: #{hilarity_nn.1} parent=47 // pred_check_branch
        %472 = sbr.rel (%p470) target = $region52
      $region51: #{hilarity_nn.1} parent=47 // pred_region
        %s473 = smul.u32 4, %s17
        %p474 = scmp.lt.s32.totalorder %s473, 7
        %s475 = scalar_select %p474, %s473, 7
        %s476 = smul.addr %s475, 8
        %s477 = scalar_lea.vmem %s5, %s476
      $region52: #{hilarity_nn.1} parent=47 // pred_fallthru
        _
    $region48: #{hilarity_nn.1} parent=5 // pred_fallthru
      _
  $region6: #{hilarity_nn.1} parent=0 // loop_footer
    %s15 = sadd.s32 1, %s11
  $region7: #{hilarity_nn.1} parent=0 // loop_footer_branch
    %10 = sbr.rel target = $region3
  $region8: #{hilarity_nn.1} parent=0 // loop_exit
    _

</llo_original>
